<compile_context>
chip_gen: v5e
topology: v5e:2x2
jax: 0.10.0
libtpu: 0.0.40
codegen_flags: <defaults>
</compile_context>

<pallas_src>
import functools
import math

import jax
import jax.numpy as jnp
from jax.experimental import pallas as pl
from jax.experimental.pallas import tpu as pltpu


def _label_smoothing_kl_kernel(logits_ref, xtgt_ref, out_ref, *,
                               confidence, smoothing_value, entropy_term,
                               n_valid_rows, block_rows):
    """One batch tile of the label-smoothed KL loss.

    logits_ref: [TB, C] native dtype (f32 or bf16)
    xtgt_ref:   [TB, 1] f32, pre-gathered logits[b, target[b]]
    out_ref:    [1, 1, 128] f32 (per-tile partial sum, lane-dense store)
    """
    i = pl.program_id(0)
    x = logits_ref[...]                                           # [TB, C] native
    tb, c = x.shape

    # Row max in the native dtype (exact for bf16/f32), upcast once afterwards.
    m = jnp.max(x, axis=1, keepdims=True).astype(jnp.float32)     # [TB, 1]
    z = x.astype(jnp.float32) - m                                 # [TB, C] f32

    # Numerically stable log-sum-exp: exp on the EUP, accumulation in f32.
    lse = jnp.log(jnp.sum(jnp.exp(z), axis=1, keepdims=True))     # [TB, 1]
    sum_z = jnp.sum(z, axis=1, keepdims=True)                     # [TB, 1]

    # logp at the target class via the wrapper-side gather (no [TB, C] scan).
    z_tgt = xtgt_ref[...] - m                                     # [TB, 1]

    # Per-row loss:  H(p) + lse - sv * sum_c z - (conf - sv) * z[target]
    # (the model probs sum to 1, so the lse terms collapse to a single +lse).
    row_loss = (entropy_term + lse
                - smoothing_value * sum_z
                - (confidence - smoothing_value) * z_tgt)         # [TB, 1]

    # Mask rows past the true batch (the over-covered last tile reads garbage;
    # the select discards any Inf/NaN those rows might produce).
    row_ids = i * block_rows + jax.lax.broadcasted_iota(jnp.int32, (tb, 1), 0)
    row_loss = jnp.where(row_ids < n_valid_rows, row_loss, 0.0)

    out_ref[...] = jnp.full((1, 1, 128), jnp.sum(row_loss), dtype=jnp.float32)


def _vmem_capacity_bytes():
    """Physical VMEM of the local TPU; conservative v7x fallback off-TPU."""
    try:
        info = pltpu.get_tpu_info()
        cap = getattr(info, "vmem_capacity_bytes", None)
        if cap:
            return int(cap)
    except Exception:
        pass
    return 64 * 1024 * 1024


def label_smoothing_loss(logits, target, smoothing, *, max_block_rows=1024):
    """logits: [B, C] float (f32/bf16), target: [B] int -> scalar f32 loss."""
    B, C = logits.shape
    confidence = 1.0 - smoothing
    # Same divide-by-zero behaviour as the PyTorch reference when C == 1.
    smoothing_value = smoothing / (C - 1)

    # H(p) per row, with the 0*log(0) := 0 convention (matches the reference's
    # `where(prob > 0)` guard for smoothing == 0 or smoothing == 1).
    entropy_term = 0.0
    if confidence > 0.0:
        entropy_term += confidence * math.log(confidence)
    if smoothing_value > 0.0:
        entropy_term += (C - 1) * smoothing_value * math.log(smoothing_value)

    # Gather logits[b, target[b]] outside the kernel (B elements; removes the
    # full-[TB, C] iota/compare/where scan from the kernel's VPU work).
    tgt = target.astype(jnp.int32)
    x_tgt = jnp.take_along_axis(logits, tgt[:, None], axis=1).astype(jnp.float32)

    # Tiny pad only when B < 8 (sublane minimum); never a full-logits copy.
    n_valid_rows = B
    if B < 8:
        logits = jnp.pad(logits, ((0, 8 - B), (0, 0)))
        x_tgt = jnp.pad(x_tgt, ((0, 8 - B), (0, 0)))
        B = 8

    # VMEM budget: double-buffered native input (2*itemsize) plus ~12 B/elem of
    # live f32 z / exp temporaries, sized against this chip's VMEM w/ headroom.
    itemsize = jnp.dtype(logits.dtype).itemsize
    vmem_cap = _vmem_capacity_bytes()
    vmem_limit = min(int(vmem_cap * 0.70), 100 * 1024 * 1024)
    budget = int(vmem_limit * 0.80)
    bytes_per_row = C * (2 * itemsize + 12)
    rows_cap = max(8, (budget // max(bytes_per_row, 1)) // 8 * 8)
    # TODO(synk): for vocabularies so large that even 8 rows exceed the budget,
    # a chunked (online-LSE) class-axis loop inside the kernel would be needed.

    tb = int(min(max_block_rows, rows_cap, (B // 8) * 8))
    tb = max(8, (tb // 8) * 8)
    num_tiles = int(pl.cdiv(B, tb))

    kernel = functools.partial(
        _label_smoothing_kl_kernel,
        confidence=confidence,
        smoothing_value=smoothing_value,
        entropy_term=entropy_term,
        n_valid_rows=n_valid_rows,
        block_rows=tb)

    cost = pl.CostEstimate(
        flops=6 * B * C + 8 * B,                       # max/cast/sub/2 reduces
        transcendentals=B * C,                         # exp in the LSE
        bytes_accessed=B * C * itemsize + B * 4 + num_tiles * 128 * 4)

    partials = pl.pallas_call(
        kernel,
        out_shape=jax.ShapeDtypeStruct((num_tiles, 1, 128), jnp.float32),
        grid=(num_tiles,),
        in_specs=[
            pl.BlockSpec((tb, C), lambda i: (i, 0)),
            pl.BlockSpec((tb, 1), lambda i: (i, 0)),
        ],
        out_specs=pl.BlockSpec((1, 1, 128), lambda i: (i, 0, 0)),
        compiler_params=pltpu.CompilerParams(
            dimension_semantics=("parallel",),
            vmem_limit_bytes=vmem_limit),
        cost_estimate=cost,
    )(logits, x_tgt)

    return jnp.sum(partials[:, 0, 0])


def _reference_loss(logits, target, smoothing):
    """Pure-JAX reference mirroring the PyTorch forward."""
    B, C = logits.shape
    confidence = 1.0 - smoothing
    smoothing_value = smoothing / (C - 1)
    prob = jnp.full((B, C), smoothing_value, jnp.float32)
    prob = prob.at[jnp.arange(B), target].set(confidence)
    logp = jax.nn.log_softmax(logits.astype(jnp.float32), axis=1)
    kl = jnp.where(prob > 0.0, prob * (jnp.log(prob) - logp), 0.0)
    return jnp.sum(kl)


if __name__ == "__main__":
    # TODO(synk): the PyTorch module picks n_classes from a global/task flag at
    # __init__ time; here it is simply the class dimension of the logits.
    smoothing = 0.1
    key = jax.random.PRNGKey(0)

    # Test 1: f32, batch a multiple of the tile.
    B, C = 8, 16
    k1, k2, k3, k4 = jax.random.split(key, 4)
    logits = jax.random.normal(k1, (B, C), dtype=jnp.float32)
    target = jax.random.randint(k2, (B,), 0, C, dtype=jnp.int32)
    loss = jax.block_until_ready(label_smoothing_loss(logits, target, smoothing))
    ref = _reference_loss(logits, target, smoothing)
    assert jnp.allclose(loss, ref, rtol=1e-5, atol=1e-5), (loss, ref)

    # Test 2: batch not a multiple of the tile (over-covered last tile + mask).
    B2 = 13
    logits2 = jax.random.normal(k3, (B2, C), dtype=jnp.float32)
    target2 = jax.random.randint(k4, (B2,), 0, C, dtype=jnp.int32)
    loss2 = jax.block_until_ready(label_smoothing_loss(logits2, target2, smoothing))
    ref2 = _reference_loss(logits2, target2, smoothing)
    assert jnp.allclose(loss2, ref2, rtol=1e-5, atol=1e-5), (loss2, ref2)

    # Test 3: native bf16 HBM read (kernel upcasts to f32 internally).
    logits_bf16 = logits.astype(jnp.bfloat16)
    loss3 = jax.block_until_ready(
        label_smoothing_loss(logits_bf16, target, smoothing))
    ref3 = _reference_loss(logits_bf16, target, smoothing)
    assert jnp.allclose(loss3, ref3, rtol=1e-4, atol=1e-4), (loss3, ref3)

    # Test 4: tiny batch (B < 8 sublane minimum path).
    B4 = 4
    logits4 = logits[:B4]
    target4 = target[:B4]
    loss4 = jax.block_until_ready(label_smoothing_loss(logits4, target4, smoothing))
    ref4 = _reference_loss(logits4, target4, smoothing)
    assert jnp.allclose(loss4, ref4, rtol=1e-5, atol=1e-5), (loss4, ref4)

    print("KERNEL_OK")
</pallas_src>

<mosaic_0001>
module attributes {stable_mosaic.version = 11 : i64} {
  func.func @_label_smoothing_kl_kernel(%arg0: i32, %arg1: memref<8x16xf32, #tpu.memory_space<vmem>>, %arg2: memref<8x1xf32, #tpu.memory_space<vmem>>, %arg3: memref<1x1x128xf32, #tpu.memory_space<vmem>>) attributes {dimension_semantics = [#tpu.dimension_semantics<parallel>], iteration_bounds = array<i64: 1>, scalar_prefetch = 0 : i64, scratch_operands = 0 : i64, tpu.core_type = #tpu.core_type<tc>, window_params = [{transform_indices = @transform_0, window_bounds = array<i64: 8, 16>}, {transform_indices = @transform_1, window_bounds = array<i64: 8, 1>}, {transform_indices = @transform_2, window_bounds = array<i64: 1, 1, 128>}]} {
    %c0 = arith.constant 0 : index
    %c0_0 = arith.constant 0 : index
    %0 = vector.load %arg1[%c0, %c0_0] : memref<8x16xf32, #tpu.memory_space<vmem>>, vector<8x16xf32>
    %cst = arith.constant dense<0xFF800000> : vector<8xf32>
    %1 = vector.multi_reduction <maximumf>, %0, %cst [1] : vector<8x16xf32> to vector<8xf32>
    %2 = vector.shape_cast %1 : vector<8xf32> to vector<8x1xf32>
    %3 = vector.broadcast %2 : vector<8x1xf32> to vector<8x16xf32>
    %4 = arith.subf %0, %3 : vector<8x16xf32>
    %5 = math.exp %4 : vector<8x16xf32>
    %cst_1 = arith.constant dense<0.000000e+00> : vector<8xf32>
    %6 = vector.multi_reduction <add>, %5, %cst_1 [1] : vector<8x16xf32> to vector<8xf32>
    %7 = vector.shape_cast %6 : vector<8xf32> to vector<8x1xf32>
    %8 = math.log %7 : vector<8x1xf32>
    %cst_2 = arith.constant dense<0.000000e+00> : vector<8xf32>
    %9 = vector.multi_reduction <add>, %4, %cst_2 [1] : vector<8x16xf32> to vector<8xf32>
    %10 = vector.shape_cast %9 : vector<8xf32> to vector<8x1xf32>
    %c0_3 = arith.constant 0 : index
    %c0_4 = arith.constant 0 : index
    %11 = vector.load %arg2[%c0_3, %c0_4] : memref<8x1xf32, #tpu.memory_space<vmem>>, vector<8x1xf32>
    %12 = arith.subf %11, %2 : vector<8x1xf32>
    %cst_5 = arith.constant -5.958880e-01 : f32
    %13 = vector.broadcast %cst_5 : f32 to vector<8x1xf32>
    %14 = arith.addf %13, %8 : vector<8x1xf32>
    %cst_6 = arith.constant 0.00666666683 : f32
    %15 = vector.broadcast %cst_6 : f32 to vector<8x1xf32>
    %16 = arith.mulf %15, %10 : vector<8x1xf32>
    %17 = arith.subf %14, %16 : vector<8x1xf32>
    %cst_7 = arith.constant 0.893333315 : f32
    %18 = vector.broadcast %cst_7 : f32 to vector<8x1xf32>
    %19 = arith.mulf %18, %12 : vector<8x1xf32>
    %20 = arith.subf %17, %19 : vector<8x1xf32>
    %c8_i32 = arith.constant 8 : i32
    %21 = arith.muli %arg0, %c8_i32 : i32
    %22 = tpu.iota {dimensions = array<i32: 0>} : vector<8x1xi32>
    %23 = vector.broadcast %21 : i32 to vector<8x1xi32>
    %24 = arith.addi %23, %22 : vector<8x1xi32>
    %c8_i32_8 = arith.constant 8 : i32
    %25 = vector.broadcast %c8_i32_8 : i32 to vector<8x1xi32>
    %26 = arith.cmpi slt, %24, %25 : vector<8x1xi32>
    %cst_9 = arith.constant 0.000000e+00 : f32
    %27 = vector.broadcast %cst_9 : f32 to vector<8x1xf32>
    %28 = arith.select %26, %20, %27 : vector<8x1xi1>, vector<8x1xf32>
    %29 = vector.shape_cast %28 : vector<8x1xf32> to vector<1x8x1xf32>
    %cst_10 = arith.constant dense<0.000000e+00> : vector<1xf32>
    %30 = vector.multi_reduction <add>, %29, %cst_10 [1, 2] : vector<1x8x1xf32> to vector<1xf32>
    %31 = vector.shape_cast %30 : vector<1xf32> to vector<1x1x1xf32>
    %32 = vector.extract %31[0, 0, 0] : f32 from vector<1x1x1xf32>
    %33 = vector.broadcast %32 : f32 to vector<1x1x128xf32>
    %c0_11 = arith.constant 0 : index
    %c0_12 = arith.constant 0 : index
    %c0_13 = arith.constant 0 : index
    %34 = vector.load %arg3[%c0_11, %c0_12, %c0_13] : memref<1x1x128xf32, #tpu.memory_space<vmem>>, vector<1x1x128xf32>
    tpu.vector_store %arg3[%c0_11, %c0_12, %c0_13], %33 {strides = array<i32>} : memref<1x1x128xf32, #tpu.memory_space<vmem>>, vector<1x1x128xf32>,
    return
  }
  func.func @transform_0(%arg0: i32) -> (i32, i32) {
    %c0_i32 = arith.constant 0 : i32
    %c0_i32_0 = arith.constant 0 : i32
    return %arg0, %c0_i32 : i32, i32
  }
  func.func @transform_1(%arg0: i32) -> (i32, i32) {
    %c0_i32 = arith.constant 0 : i32
    %c0_i32_0 = arith.constant 0 : i32
    return %arg0, %c0_i32 : i32, i32
  }
  func.func @transform_2(%arg0: i32) -> (i32, i32, i32) {
    %c0_i32 = arith.constant 0 : i32
    %c0_i32_0 = arith.constant 0 : i32
    %c0_i32_1 = arith.constant 0 : i32
    return %arg0, %c0_i32, %c0_i32_0 : i32, i32, i32
  }
}

</mosaic_0001>

<llo_original>
// kernel: tpu_custom_call.1
$region0: #{tpu_custom_call.1}
  #allocation0 [shape = 'u32[]', space=smem, size = 0x4, offset = 0x4, fixed_abs, tag = 'smem constant byte address 0x4 - core index']
  #allocation1 [shape = 'u32[72,128]{1,0:T(1,128)}', space=vmem, size = 0x9000, scoped, tag = 'internal scratch']
  %s0 = inlined_call_operand.vmem [shape: f32[8,16], index: 0, kind: input, shape index: {}]
  %s1 = inlined_call_operand.vmem [shape: f32[8,1], index: 1, kind: input, shape index: {}]
  %s2 = inlined_call_operand.hbm [shape: f32[1,1,128], index: 2, kind: output, shape index: {}]
  %s3 = sld [smem:[#allocation0]]
  $region18: #{tpu_custom_call.1} parent=0
    _
  %s5 = ssub.s32 1, %s3
  %s6 = scalar_select 0, %s5, %s3
  $region1: #{tpu_custom_call.1} parent=0
    #allocation2 [shape = 'u8[512]{0}', space=vmem, size = 0x400, scoped, tag = 'output window, operand 0, single buffered']
    #allocation3 [shape = 's32[1]{0}', space=sflag, size = 0x4, scoped, tag = 'scoped memory for tpu_custom_call.1']
    %7 = vsyncpa [#allocation3], 0
    // Predicated region
    $region2: #{tpu_custom_call.1} parent=1 // pred_check
      _
    $region3: #{tpu_custom_call.1} parent=1 // pred_check_branch
      %9 = sbr.rel (0) target = $region5
    $region4: #{tpu_custom_call.1} parent=1 // pred_region
      _
    $region5: #{tpu_custom_call.1} parent=1 // pred_fallthru
      _
    // Predicated region
    $region6: #{tpu_custom_call.1} parent=1 // pred_check
      _
    $region7: #{tpu_custom_call.1} parent=1 // pred_check_branch
      %11 = sbr.rel (0) target = $region9
    $region8: #{tpu_custom_call.1} parent=1 // pred_region
      _
    $region9: #{tpu_custom_call.1} parent=1 // pred_fallthru
      _
    %v12 = vld [vmem:[%s0] sm:$0xff]
    %vm13 = vcmask 130048
    %v14 = vsel %vm13, %v12, -inf
    %15 = vmax.xlane.f32.xlu0 %v14
    %v16 = vpop.xlane.xlu0 %15
    %v17 = vsub.f32 %v12, %v16
    %v18 = vmul.f32 %v17, 1.442695
    %v19 = vpow.pop %v18
    %v20 = vsel %vm13, %v19, 0.0
    %21 = vadd.xlane.f32.xlu0 %v20
    %v22 = vpop.xlane.xlu0 %21
    %v23 = vlog2.pop %v22
    %v24 = vmul.f32 %v23, 0.6931472
    %v25 = vsel %vm13, %v17, 0.0
    %26 = vadd.xlane.f32.xlu0 %v25
    %v27 = vpop.xlane.xlu0 %26
    %v28 = vld [vmem:[%s1] sm:$0xff]
    %v29 = vsub.f32 %v28, %v16
    %v30 = vadd.f32 %v24, -0.595888
    %v31 = vmul.f32 %v27, 0.006666667
    %v32 = vsub.f32 %v30, %v31
    %v33 = vmul.f32 %v29, 0.8933333
    %v34 = vsub.f32 %v32, %v33
    %s35 = smul.u32 0, 8
    %v36 = vlaneseq
    %v37 = vshrl.u32 %v36, 7
    %v38 = vstv %s35
    %v39 = vadd.s32 %v38, %v37
    %vm40 = vcmp.lt.s32.totalorder %v39, 8
    %v41 = vsel %vm40, %v34, 0.0
    %vm42 = vcmask 7168
    %v43 = vsel %vm42, %v41, 0.0
    %44 = vadd.xlane.f32.xlu0 %v43
    %v45 = vpop.xlane.xlu0 %44
    %v46 = vrot.slane %v45, 4
    %v47 = vadd.f32 %v45, %v46
    %v48 = vrot.slane %v47, 2
    %v49 = vadd.f32 %v47, %v48
    %v50 = vrot.slane %v49, 1
    %v51 = vadd.f32 %v49, %v50
    %s52 = vtos %v51
    %v53 = vstv %s52
    %54 = vst [vmem:[#allocation2] sm:$0x1] %v53
    // Predicated region
    $region10: #{tpu_custom_call.1} parent=1 // pred_check
      _
    $region11: #{tpu_custom_call.1} parent=1 // pred_check_branch
      %56 = sbr.rel (0) target = $region13
    $region12: #{tpu_custom_call.1} parent=1 // pred_region
      %58 = vsyncadd [#allocation3], 0
      %s60 = sshll.u32 [#allocation2], 4
      %s61 = int_to_ptr.vmem [resolvable:$true] %s60
      %s62 = sshll.u32 %s2, 4
      %s63 = int_to_ptr.hbm [resolvable:$true] %s62
      %65 = dma.vmem_to_hbm [thread:$0]  %s61, 16, %s63, [#allocation3]
    $region13: #{tpu_custom_call.1} parent=1 // pred_fallthru
      _
    // Predicated region
    $region14: #{tpu_custom_call.1} parent=1 // pred_check
      _
    $region15: #{tpu_custom_call.1} parent=1 // pred_check_branch
      %67 = sbr.rel (0) target = $region17
    $region16: #{tpu_custom_call.1} parent=1 // pred_region
      %69 = dma.done [#allocation3], 16
    $region17: #{tpu_custom_call.1} parent=1 // pred_fallthru
      _
    %70 = vsyncpa [#allocation3], 1

</llo_original>
